<compile_context>
chip_gen: v7x
topology: tpu7x:2x2x1
jax: 0.10.0
libtpu: 0.0.40
codegen_flags: <defaults>
</compile_context>

<pallas_src>
import functools

import jax
import jax.numpy as jnp
from jax import lax
from jax.experimental import pallas as pl
from jax.experimental.pallas import tpu as pltpu


def _wattention_kernel(x_ref, w1_ref, b1_ref, w2_ref, b2_ref,
                       out_ref, attn_ref, *, t_valid):
    block_b, T, D = x_ref.shape
    H = w1_ref.shape[1]

    x = x_ref[...]                                   # (block_b, T, D), input dtype
    x2d = x.reshape(block_b * T, D)                  # free view: T sublane-aligned

    # Layer 1 (D -> H) on the MXU with M = block_b*T rows, f32 accumulate.
    h = jnp.dot(x2d, w1_ref[...],
                preferred_element_type=jnp.float32,
                precision=lax.Precision.HIGHEST)
    h = jnp.maximum(h + b1_ref[...], 0.0)            # (block_b*T, H), f32

    # Layer 2 (H -> 1): VPU multiply + lane reduce (avoid an N=1 MXU matmul).
    hw = (h * w2_ref[...]).reshape(block_b, T, H)
    scores = jnp.sum(hw, axis=-1) + b2_ref[0]        # (block_b, T), T on lanes

    if t_valid < T:
        lane = lax.broadcasted_iota(jnp.int32, (block_b, T), 1)
        scores = jnp.where(lane < t_valid, scores, -jnp.inf)

    # Softmax over the sequence axis (lane reductions).  Exact divide: attn is a
    # user-visible output, the EUP approx reciprocal is not accurate enough.
    m = jnp.max(scores, axis=-1, keepdims=True)      # (block_b, 1)
    e = jnp.exp(scores - m)                          # (block_b, T)
    denom = jnp.sum(e, axis=-1, keepdims=True)       # (block_b, 1)
    attn = e / denom                                 # (block_b, T), f32

    # Weighted sum over T on the VPU (broadcast-mul + sublane reduce).  Keeps
    # the MXU free; the q=1-per-batch matmul wasted >99% of the MXU rows.
    weighted = jnp.sum(x.astype(jnp.float32) * attn[:, :, None], axis=1)

    out_ref[...] = weighted.astype(out_ref.dtype)    # (block_b, D)
    attn_ref[...] = attn.astype(attn_ref.dtype)      # (block_b, T)


def _total_vmem_bytes():
    """Generation-aware physical VMEM size (falls back to v7x's 64 MiB/TC)."""
    try:
        info = pltpu.get_tpu_info()
        for attr in ("vmem_capacity_bytes", "vmem_size_bytes", "vmem_bytes"):
            v = getattr(info, attr, None)
            if v:
                return int(v)
    except Exception:
        pass
    return 64 * 1024 * 1024


def _choose_block_b(B, T, D, H, x_itemsize, budget):
    """Largest batch block (multiple of 8, or full B) fitting the VMEM budget."""
    per_b = (2 * T * D * x_itemsize        # x block (double-buffered)
             + 2 * D * 4 + 2 * T * 4       # out / attn blocks (double-buffered)
             + 2 * T * H * 4               # h and h*w2 f32 intermediates
             + T * D * 4)                  # broadcast-mul f32 intermediate
    fixed = D * H * x_itemsize + 4 * H * 4 + (64 << 10)  # w1 (single-buffered) + biases + slack
    avail = max(per_b, budget - fixed)
    bmax = max(1, avail // per_b)
    if bmax >= B:
        block_b = B                        # whole batch in one step (full dim is legal)
    else:
        block_b = max(8, (bmax // 8) * 8)  # round DOWN: never exceed the budget
    # Megacore (v7x): with enough batches, prefer >= 2 grid steps so the
    # "parallel" axis can shard across the two TensorCores.
    if B >= 16:
        cap = max(8, (((B + 1) // 2) // 8) * 8)
        block_b = min(block_b, cap)
    return int(min(block_b, B))


def wattention(lstm_out, w1, b1, w2, b2, *, block_b=None, interpret=False):
    """Pallas implementation of WAttention.forward.

    Args:
      lstm_out: (B, T, D)
      w1: (D, H), b1: (H,), w2: (H, 1), b2: (1,)
    Returns:
      weighted_output: (B, D), attn_weights: (B, T)
    """
    B, T, D = lstm_out.shape
    H = w1.shape[1]
    x = lstm_out
    x_itemsize = x.dtype.itemsize

    # Pad T to a sublane multiple (8 for 4-byte dtypes, 16 for 2-byte) so the
    # in-kernel (block_b, T, D) -> (block_b*T, D) reshape is a free view.
    sub = max(8, 32 // max(1, x_itemsize))
    T_pad = ((T + sub - 1) // sub) * sub
    if T_pad != T:
        x = jnp.pad(x, ((0, 0), (0, T_pad - T), (0, 0)))

    total_vmem = _total_vmem_bytes()
    if block_b is None:
        budget = int(total_vmem * 0.45)    # headroom for compiler scratch
        block_b = _choose_block_b(B, T_pad, D, H, x_itemsize, budget)
    else:
        block_b = int(min(block_b, B))
        if block_b < B:                    # sublane-align user-provided blocks
            block_b = min(B, max(8, (block_b // 8) * 8))

    num_blocks = -(-B // block_b)
    Bp = num_blocks * block_b
    if Bp != B:
        # Padded batch rows see a masked-uniform softmax over zeros; sliced off.
        x = jnp.pad(x, ((0, Bp - B), (0, 0), (0, 0)))

    # Matmul operands keep the input dtype (bf16 stays bf16 -> bf16 MXU path
    # with f32 accumulate); small bias / w2 vectors stay f32 for the VPU math.
    w1_m = w1.astype(x.dtype)
    b1_2d = b1.reshape(1, H).astype(jnp.float32)
    w2_row = w2.reshape(H, 1).T.astype(jnp.float32)   # (1, H)
    b2_1d = b2.reshape(1).astype(jnp.float32)

    def _invariant_spec(shape):
        idx = lambda b: (0,) * len(shape)
        try:   # single-buffer grid-invariant operands (halves their VMEM cost)
            return pl.BlockSpec(shape, idx, pipeline_mode=pl.Buffered(1))
        except Exception:
            return pl.BlockSpec(shape, idx)

    grid_spec = pltpu.PrefetchScalarGridSpec(
        num_scalar_prefetch=0,
        grid=(num_blocks,),
        in_specs=[
            pl.BlockSpec((block_b, T_pad, D), lambda b: (b, 0, 0)),   # x block
            _invariant_spec((D, H)),                                  # w1
            _invariant_spec((1, H)),                                  # b1
            _invariant_spec((1, H)),                                  # w2 row
            pl.BlockSpec(memory_space=pltpu.MemorySpace.SMEM),        # b2 scalar
        ],
        out_specs=[
            pl.BlockSpec((block_b, D), lambda b: (b, 0)),             # weighted
            pl.BlockSpec((block_b, T_pad), lambda b: (b, 0)),         # attn
        ],
    )

    out_shapes = (
        jax.ShapeDtypeStruct((Bp, D), lstm_out.dtype),
        jax.ShapeDtypeStruct((Bp, T_pad), lstm_out.dtype),
    )

    kernel = functools.partial(_wattention_kernel, t_valid=T)

    weighted, attn = pl.pallas_call(
        kernel,
        out_shape=out_shapes,
        grid_spec=grid_spec,
        compiler_params=pltpu.CompilerParams(
            dimension_semantics=("parallel",),
            vmem_limit_bytes=int(total_vmem * 0.9)),
        interpret=interpret,
    )(x, w1_m, b1_2d, w2_row, b2_1d)

    return weighted[:B], attn[:B, :T]


def wattention_ref(lstm_out, w1, b1, w2, b2):
    """Pure-JAX reference mirroring the PyTorch forward (full-precision matmuls)."""
    h = jnp.maximum(
        jnp.matmul(lstm_out, w1, precision=lax.Precision.HIGHEST) + b1, 0.0)
    scores = (jnp.matmul(h, w2, precision=lax.Precision.HIGHEST) + b2)[..., 0]
    attn = jax.nn.softmax(scores, axis=1)                          # (B, T)
    weighted = jnp.sum(lstm_out * attn[..., None], axis=1)         # (B, D)
    return weighted, attn


if __name__ == "__main__":
    B, T, D, H = 2, 8, 32, 32   # batch, seq_len, input_dim, hidden_dim

    key = jax.random.PRNGKey(0)
    k_x, k_w1, k_b1, k_w2, k_b2 = jax.random.split(key, 5)

    lstm_out = jax.random.normal(k_x, (B, T, D), dtype=jnp.float32)
    # nn.Linear-like parameters stored as (in, out).
    w1 = jax.random.normal(k_w1, (D, H), dtype=jnp.float32) * 0.1
    b1 = jax.random.normal(k_b1, (H,), dtype=jnp.float32) * 0.1
    w2 = jax.random.normal(k_w2, (H, 1), dtype=jnp.float32) * 0.1
    b2 = jax.random.normal(k_b2, (1,), dtype=jnp.float32) * 0.1

    weighted_out, attn_weights = wattention(lstm_out, w1, b1, w2, b2)
    jax.block_until_ready((weighted_out, attn_weights))

    ref_out, ref_attn = wattention_ref(lstm_out, w1, b1, w2, b2)
    assert weighted_out.shape == (B, D) and attn_weights.shape == (B, T)

    out_err = float(jnp.max(jnp.abs(weighted_out - ref_out)))
    attn_err = float(jnp.max(jnp.abs(attn_weights - ref_attn)))
    assert jnp.allclose(weighted_out, ref_out, atol=1e-4, rtol=1e-4), out_err
    assert jnp.allclose(attn_weights, ref_attn, atol=1e-4, rtol=1e-4), attn_err

    print("KERNEL_OK")
</pallas_src>

<mosaic_0001>
module attributes {stable_mosaic.version = 11 : i64} {
  func.func @_wattention_kernel(%arg0: i32, %arg1: memref<2x8x32xf32, #tpu.memory_space<vmem>>, %arg2: memref<32x32xf32, #tpu.memory_space<vmem>>, %arg3: memref<1x32xf32, #tpu.memory_space<vmem>>, %arg4: memref<1x32xf32, #tpu.memory_space<vmem>>, %arg5: memref<1xf32, #tpu.memory_space<smem>>, %arg6: memref<2x32xf32, #tpu.memory_space<vmem>>, %arg7: memref<2x8xf32, #tpu.memory_space<vmem>>) attributes {dimension_semantics = [#tpu.dimension_semantics<parallel>], iteration_bounds = array<i64: 1>, scalar_prefetch = 0 : i64, scratch_operands = 0 : i64, tpu.core_type = #tpu.core_type<tc>, window_params = [{transform_indices = @transform_0, window_bounds = array<i64: 2, 8, 32>}, {pipeline_mode = #tpu.pipeline_mode<synchronous>, transform_indices = @transform_1, window_bounds = array<i64: 32, 32>}, {pipeline_mode = #tpu.pipeline_mode<synchronous>, transform_indices = @transform_2, window_bounds = array<i64: 1, 32>}, {pipeline_mode = #tpu.pipeline_mode<synchronous>, transform_indices = @transform_3, window_bounds = array<i64: 1, 32>}, {transform_indices = @transform_4, window_bounds = array<i64: 1>}, {transform_indices = @transform_5, window_bounds = array<i64: 2, 32>}, {transform_indices = @transform_6, window_bounds = array<i64: 2, 8>}]} {
    %c0 = arith.constant 0 : index
    %c0_0 = arith.constant 0 : index
    %c0_1 = arith.constant 0 : index
    %0 = vector.load %arg1[%c0, %c0_0, %c0_1] : memref<2x8x32xf32, #tpu.memory_space<vmem>>, vector<2x8x32xf32>
    %1 = vector.shape_cast %0 : vector<2x8x32xf32> to vector<16x32xf32>
    %c0_2 = arith.constant 0 : index
    %c0_3 = arith.constant 0 : index
    %2 = vector.load %arg2[%c0_2, %c0_3] : memref<32x32xf32, #tpu.memory_space<vmem>>, vector<32x32xf32>
    %cst = arith.constant dense<0.000000e+00> : vector<16x32xf32>
    %3 = tpu.matmul %1, %2, %cst {dimension_numbers = #tpu.dot_dimension_numbers<[1], [0], [0], [1], [0, 0, 1, 1], [], []>, precision = #tpu.contract_precision<fp32>} : vector<16x32xf32>, vector<32x32xf32>, vector<16x32xf32> -> vector<16x32xf32>
    %c0_4 = arith.constant 0 : index
    %c0_5 = arith.constant 0 : index
    %4 = vector.load %arg3[%c0_4, %c0_5] : memref<1x32xf32, #tpu.memory_space<vmem>>, vector<1x32xf32>
    %5 = vector.broadcast %4 : vector<1x32xf32> to vector<16x32xf32>
    %6 = arith.addf %3, %5 : vector<16x32xf32>
    %cst_6 = arith.constant 0.000000e+00 : f32
    %7 = vector.broadcast %cst_6 : f32 to vector<16x32xf32>
    %8 = arith.maximumf %6, %7 : vector<16x32xf32>
    %c0_7 = arith.constant 0 : index
    %c0_8 = arith.constant 0 : index
    %9 = vector.load %arg4[%c0_7, %c0_8] : memref<1x32xf32, #tpu.memory_space<vmem>>, vector<1x32xf32>
    %10 = vector.broadcast %9 : vector<1x32xf32> to vector<16x32xf32>
    %11 = arith.mulf %8, %10 : vector<16x32xf32>
    %12 = vector.shape_cast %11 : vector<16x32xf32> to vector<2x8x32xf32>
    %cst_9 = arith.constant dense<0.000000e+00> : vector<2x8xf32>
    %13 = vector.multi_reduction <add>, %12, %cst_9 [2] : vector<2x8x32xf32> to vector<2x8xf32>
    %c0_10 = arith.constant 0 : index
    %14 = memref.load %arg5[%c0_10] : memref<1xf32, #tpu.memory_space<smem>>
    %15 = vector.broadcast %14 : f32 to vector<2x8xf32>
    %16 = arith.addf %13, %15 : vector<2x8xf32>
    %cst_11 = arith.constant dense<0xFF800000> : vector<2xf32>
    %17 = vector.multi_reduction <maximumf>, %16, %cst_11 [1] : vector<2x8xf32> to vector<2xf32>
    %18 = vector.shape_cast %17 : vector<2xf32> to vector<2x1xf32>
    %19 = vector.broadcast %18 : vector<2x1xf32> to vector<2x8xf32>
    %20 = arith.subf %16, %19 : vector<2x8xf32>
    %21 = math.exp %20 : vector<2x8xf32>
    %cst_12 = arith.constant dense<0.000000e+00> : vector<2xf32>
    %22 = vector.multi_reduction <add>, %21, %cst_12 [1] : vector<2x8xf32> to vector<2xf32>
    %23 = vector.shape_cast %22 : vector<2xf32> to vector<2x1xf32>
    %24 = vector.broadcast %23 : vector<2x1xf32> to vector<2x8xf32>
    %25 = arith.divf %21, %24 : vector<2x8xf32>
    %26 = vector.shape_cast %25 : vector<2x8xf32> to vector<2x8x1xf32>
    %27 = vector.broadcast %26 : vector<2x8x1xf32> to vector<2x8x32xf32>
    %28 = arith.mulf %0, %27 : vector<2x8x32xf32>
    %cst_13 = arith.constant dense<0.000000e+00> : vector<2x32xf32>
    %29 = vector.multi_reduction <add>, %28, %cst_13 [1] : vector<2x8x32xf32> to vector<2x32xf32>
    %c0_14 = arith.constant 0 : index
    %c0_15 = arith.constant 0 : index
    %30 = vector.load %arg6[%c0_14, %c0_15] : memref<2x32xf32, #tpu.memory_space<vmem>>, vector<2x32xf32>
    tpu.vector_store %arg6[%c0_14, %c0_15], %29 {strides = array<i32>} : memref<2x32xf32, #tpu.memory_space<vmem>>, vector<2x32xf32>,
    %c0_16 = arith.constant 0 : index
    %c0_17 = arith.constant 0 : index
    %31 = vector.load %arg7[%c0_16, %c0_17] : memref<2x8xf32, #tpu.memory_space<vmem>>, vector<2x8xf32>
    tpu.vector_store %arg7[%c0_16, %c0_17], %25 {strides = array<i32>} : memref<2x8xf32, #tpu.memory_space<vmem>>, vector<2x8xf32>,
    return
  }
  func.func @transform_0(%arg0: i32) -> (i32, i32, i32) {
    %c0_i32 = arith.constant 0 : i32
    %c0_i32_0 = arith.constant 0 : i32
    %c0_i32_1 = arith.constant 0 : i32
    return %arg0, %c0_i32, %c0_i32_0 : i32, i32, i32
  }
  func.func @transform_1(%arg0: i32) -> (i32, i32) {
    %c0_i32 = arith.constant 0 : i32
    %c0_i32_0 = arith.constant 0 : i32
    %c0_i32_1 = arith.constant 0 : i32
    return %c0_i32, %c0_i32_0 : i32, i32
  }
  func.func @transform_2(%arg0: i32) -> (i32, i32) {
    %c0_i32 = arith.constant 0 : i32
    %c0_i32_0 = arith.constant 0 : i32
    %c0_i32_1 = arith.constant 0 : i32
    return %c0_i32, %c0_i32_0 : i32, i32
  }
  func.func @transform_3(%arg0: i32) -> (i32, i32) {
    %c0_i32 = arith.constant 0 : i32
    %c0_i32_0 = arith.constant 0 : i32
    %c0_i32_1 = arith.constant 0 : i32
    return %c0_i32, %c0_i32_0 : i32, i32
  }
  func.func @transform_4(%arg0: i32) -> i32 {
    %c0_i32 = arith.constant 0 : i32
    %c0_i32_0 = arith.constant 0 : i32
    return %c0_i32 : i32
  }
  func.func @transform_5(%arg0: i32) -> (i32, i32) {
    %c0_i32 = arith.constant 0 : i32
    %c0_i32_0 = arith.constant 0 : i32
    return %arg0, %c0_i32 : i32, i32
  }
  func.func @transform_6(%arg0: i32) -> (i32, i32) {
    %c0_i32 = arith.constant 0 : i32
    %c0_i32_0 = arith.constant 0 : i32
    return %arg0, %c0_i32 : i32, i32
  }
}

</mosaic_0001>

<llo_original>
// kernel: tpu_custom_call.1
$region0: #{tpu_custom_call.1}
  #allocation0 [shape = 'u32[]', space=smem, size = 0x4, offset = 0x4, fixed_abs, tag = 'smem constant byte address 0x4 - core index']
  #allocation1 [shape = 'u32[144,128]{1,0:T(1,128)}', space=vmem, size = 0x12000, scoped, tag = 'internal scratch']
  #allocation2 [shape = 'f32[1]{0:T(128)S(6)}', space=smem, size = 0x200, scoped, tag = 'scoped memory for tpu_custom_call.1']
  %s0 = inlined_call_operand.hbm [shape: f32[2,8,32], index: 0, kind: input, shape index: {}]
  %s1 = inlined_call_operand.hbm [shape: f32[32,32], index: 1, kind: input, shape index: {}]
  %s2 = inlined_call_operand.vmem [shape: f32[1,32], index: 2, kind: input, shape index: {}]
  %s3 = inlined_call_operand.vmem [shape: f32[1,32], index: 3, kind: input, shape index: {}]
  %s4 = inlined_call_operand.<no memory space> [shape: f32[1], index: 4, kind: input, shape index: {}]
  %s5 = inlined_call_operand.hbm [shape: f32[2,32], index: 5, kind: output, shape index: {0}]
  %s6 = inlined_call_operand.hbm [shape: f32[2,8], index: 6, kind: output, shape index: {1}]
  %7 = xla_tuple %s5, %s6
  %s8 = sld [smem:[#allocation0]]
  $region46: #{tpu_custom_call.1} parent=0
    _
  %s10 = ssub.s32 1, %s8
  %s11 = scalar_select 0, %s10, %s8
  %12 = sst [smem:[#allocation2]] %s4
  $region1: #{tpu_custom_call.1} parent=0
    #allocation3 [shape = 'u8[8192]{0}', space=vmem, size = 0x2000, scoped, tag = 'input window, operand 0, single buffered']
    #allocation4 [shape = 's32[1]{0}', space=sflag, size = 0x4, scoped, tag = 'scoped memory for tpu_custom_call.1']
    #allocation5 [shape = 's32[1]{0}', space=sflag, size = 0x4, scoped, tag = 'scoped memory for tpu_custom_call.1']
    #allocation6 [shape = 'u8[16384]{0}', space=vmem, size = 0x4000, scoped, tag = 'input window, operand 1, single buffered']
    #allocation7 [shape = 's32[1]{0}', space=sflag, size = 0x4, scoped, tag = 'scoped memory for tpu_custom_call.1']
    #allocation8 [shape = 'u8[1024]{0}', space=vmem, size = 0x400, scoped, tag = 'output window, operand 0, single buffered']
    #allocation9 [shape = 'u8[1024]{0}', space=vmem, size = 0x400, scoped, tag = 'output window, operand 1, single buffered']
    #allocation10 [shape = 's32[1]{0}', space=sflag, size = 0x4, scoped, tag = 'scoped memory for tpu_custom_call.1']
    %13 = vsyncpa [#allocation4], 0
    %14 = vsyncpa [#allocation7], 0
    %15 = vsyncpa [#allocation5], 0
    %16 = vsyncpa [#allocation10], 0
    // Predicated region
    $region2: #{tpu_custom_call.1} parent=1 // pred_check
      _
    $region3: #{tpu_custom_call.1} parent=1 // pred_check_branch
      %18 = sbr.rel (0) target = $region5
    $region4: #{tpu_custom_call.1} parent=1 // pred_region
      %s20 = ssub.s32 256, 256
      %21 = vsyncadd [#allocation4], %s20
      %s22 = sshll.u32 [#allocation3], 4
      %s23 = int_to_ptr.vmem [resolvable:$true] %s22
      %28 = dma.hbm_to_vmem [thread:$0]  %s0, 256, %s23, [#allocation4], 128, 128, 8
    $region5: #{tpu_custom_call.1} parent=1 // pred_fallthru
      _
    // Predicated region
    $region6: #{tpu_custom_call.1} parent=1 // pred_check
      _
    $region7: #{tpu_custom_call.1} parent=1 // pred_check_branch
      %30 = sbr.rel (0) target = $region9
    $region8: #{tpu_custom_call.1} parent=1 // pred_region
      %s32 = ssub.s32 512, 512
      %33 = vsyncadd [#allocation7], %s32
      %s34 = sshll.u32 [#allocation6], 4
      %s35 = int_to_ptr.vmem [resolvable:$true] %s34
      %40 = dma.hbm_to_vmem [thread:$0]  %s1, 512, %s35, [#allocation7], 128, 128, 8
    $region9: #{tpu_custom_call.1} parent=1 // pred_fallthru
      _
    // Predicated region
    $region10: #{tpu_custom_call.1} parent=1 // pred_check
      _
    $region11: #{tpu_custom_call.1} parent=1 // pred_check_branch
      %42 = sbr.rel (0) target = $region13
    $region12: #{tpu_custom_call.1} parent=1 // pred_region
      _
    $region13: #{tpu_custom_call.1} parent=1 // pred_fallthru
      _
    // Predicated region
    $region14: #{tpu_custom_call.1} parent=1 // pred_check
      _
    $region15: #{tpu_custom_call.1} parent=1 // pred_check_branch
      %44 = sbr.rel (0) target = $region17
    $region16: #{tpu_custom_call.1} parent=1 // pred_region
      _
    $region17: #{tpu_custom_call.1} parent=1 // pred_fallthru
      _
    // Predicated region
    $region18: #{tpu_custom_call.1} parent=1 // pred_check
      _
    $region19: #{tpu_custom_call.1} parent=1 // pred_check_branch
      %46 = sbr.rel (0) target = $region21
    $region20: #{tpu_custom_call.1} parent=1 // pred_region
      _
    $region21: #{tpu_custom_call.1} parent=1 // pred_fallthru
      _
    // Predicated region
    $region22: #{tpu_custom_call.1} parent=1 // pred_check
      _
    $region23: #{tpu_custom_call.1} parent=1 // pred_check_branch
      %48 = sbr.rel (0) target = $region25
    $region24: #{tpu_custom_call.1} parent=1 // pred_region
      %49 = dma.done [#allocation4], 256
    $region25: #{tpu_custom_call.1} parent=1 // pred_fallthru
      _
    // Predicated region
    $region26: #{tpu_custom_call.1} parent=1 // pred_check
      _
    $region27: #{tpu_custom_call.1} parent=1 // pred_check_branch
      %51 = sbr.rel (0) target = $region29
    $region28: #{tpu_custom_call.1} parent=1 // pred_region
      %52 = dma.done [#allocation7], 512
    $region29: #{tpu_custom_call.1} parent=1 // pred_fallthru
      _
    %v53 = vld [vmem:[#allocation3] sm:$0xff]
    %v54 = vld [vmem:[#allocation3 + $0x8] sm:$0xff]
    %v55 = vld [vmem:[#allocation6] sm:$0xff]
    %v56 = vld [vmem:[#allocation6 + $0x8] sm:$0xff]
    %v57 = vld [vmem:[#allocation6 + $0x10] sm:$0xff]
    %v58 = vld [vmem:[#allocation6 + $0x18] sm:$0xff]
    %v59 = vld [vmem:[%s2] sm:$0x1]
    %v61 = vlaneseq
    %v62 = vshrl.u32 %v61, 7
    %v63 = vsub.s32 0, %v62
    %v64 = vrot.slane %v59, %v63
    %vm66 = vcmask 261120
    %v68 = vsel %vm66, %v53, 0
    %v71 = vsel %vm66, %v54, 0
    %73 = vmatprep.subr.mxu0 0.0
    %v74 = vand.u32 %v55, 4294901760
    %75 = vmatpush1.msra.mxu0 %v74
    %76 = vmatprep.subr.mxu0 0.0
    %v77 = vand.u32 %v56, 4294901760
    %78 = vmatpush1.msra.mxu0 %v77
    %79 = vmatprep.subr.mxu0 0.0
    %v80 = vand.u32 %v57, 4294901760
    %81 = vmatpush1.msra.mxu0 %v80
    %82 = vmatprep.subr.mxu0 0.0
    %v83 = vand.u32 %v58, 4294901760
    %84 = vmatpush1.msra.mxu0 %v83
    %85 = vmatprep.subr.mxu0 0.0
    %86 = vmatpush1.msra.mxu0 0.0
    %87 = vmatprep.subr.mxu0 0.0
    %88 = vmatpush1.msra.mxu0 0.0
    %89 = vmatprep.subr.mxu0 0.0
    %90 = vmatpush1.msra.mxu0 0.0
    %91 = vmatprep.subr.mxu0 0.0
    %92 = vmatpush1.msra.mxu0 0.0
    %93 = vmatprep.subr.mxu0 0.0
    %94 = vmatpush1.msra.mxu0 0.0
    %95 = vmatprep.subr.mxu0 0.0
    %96 = vmatpush1.msra.mxu0 0.0
    %97 = vmatprep.subr.mxu0 0.0
    %98 = vmatpush1.msra.mxu0 0.0
    %99 = vmatprep.subr.mxu0 0.0
    %100 = vmatpush1.msra.mxu0 0.0
    %101 = vmatprep.subr.mxu0 0.0
    %102 = vmatpush1.msra.mxu0 0.0
    %103 = vmatprep.subr.mxu0 0.0
    %104 = vmatpush1.msra.mxu0 0.0
    %105 = vmatprep.subr.mxu0 0.0
    %106 = vmatpush1.msra.mxu0 0.0
    %107 = vmatprep.subr.mxu0 0.0
    %108 = vmatpush1.msra.mxu0 0.0
    %109 = vmatprep.subr.mxu0 0.0
    %110 = vmatpush1.msra.mxu0 0.0
    %111 = vmatprep.subr.mxu0 0.0
    %112 = vmatpush1.msra.mxu0 0.0
    %113 = vmatprep.subr.mxu0 0.0
    %114 = vmatpush1.msra.mxu0 0.0
    %115 = vmatprep.subr.mxu0 0.0
    %116 = vmatpush1.msra.mxu0 0.0
    %117 = vmatprep.subr.mxu0 0.0
    %118 = vmatpush1.msra.mxu0 0.0
    %119 = vmatprep.subr.mxu0 0.0
    %120 = vmatpush1.msra.mxu0 0.0
    %121 = vmatprep.subr.mxu0 0.0
    %122 = vmatpush1.msra.mxu0 0.0
    %123 = vmatprep.subr.mxu0 0.0
    %124 = vmatpush1.msra.mxu0 0.0
    %125 = vmatprep.subr.mxu0 0.0
    %126 = vmatpush1.msra.mxu0 0.0
    %127 = vmatprep.subr.mxu0 0.0
    %128 = vmatpush1.msra.mxu0 0.0
    %129 = vmatprep.subr.mxu0 0.0
    %130 = vmatpush1.msra.mxu0 0.0
    %131 = vmatprep.subr.mxu0 0.0
    %132 = vmatpush1.msra.mxu0 0.0
    %133 = vmatprep.subr.mxu0 0.0
    %134 = vmatpush1.msra.mxu0 0.0
    %135 = vmatprep.subr.mxu0 0.0
    %136 = vmatpush1.msra.mxu0 0.0
    %137 = vmatprep.subr.mxu0 0.0
    %138 = vmatpush1.msra.mxu0 0.0
    %139 = vmatprep.subr.mxu0 0.0
    %140 = vmatpush1.msra.mxu0 0.0
    %141 = vmatprep.mubr.f32.mxu0 0.0
    %v142 = vand.u32 %v68, 4294901760
    %v143 = vsub.f32 %v68, %v142
    %v144 = vand.u32 %v143, 4294901760
    %v145 = vsub.f32 %v143, %v144
    %v146 = vand.u32 %v145, 4294901760
    %147 = vmatmul.mubr.f32.gmra.mrb[0].mxu0 %v146
    %v148 = vpop.f32.mrb[0].mxu0
    %v149 = vadd.f32 %v64, %v148
    %v150 = vpop.f32.mrb[0].mxu0
    %151 = vmatprep.mubr.f32.mxu0 0.0
    %v152 = vand.u32 %v71, 4294901760
    %v153 = vsub.f32 %v71, %v152
    %v154 = vand.u32 %v153, 4294901760
    %v155 = vsub.f32 %v153, %v154
    %v156 = vand.u32 %v155, 4294901760
    %157 = vmatmul.mubr.f32.gmra.mrb[0].mxu0 %v156
    %v158 = vpop.f32.mrb[0].mxu0
    %v159 = vadd.f32 %v64, %v158
    %v160 = vpop.f32.mrb[0].mxu0
    %161 = vdwg.mxu0
    %162 = vmatprep.subr.mxu0 0.0
    %v163 = vand.u32 %v55, 4294901760
    %v164 = vsub.f32 %v55, %v163
    %v165 = vand.u32 %v164, 4294901760
    %v166 = vsub.f32 %v164, %v165
    %v167 = vand.u32 %v166, 4294901760
    %168 = vmatpush1.msra.mxu0 %v167
    %169 = vmatprep.subr.mxu0 0.0
    %v170 = vand.u32 %v56, 4294901760
    %v171 = vsub.f32 %v56, %v170
    %v172 = vand.u32 %v171, 4294901760
    %v173 = vsub.f32 %v171, %v172
    %v174 = vand.u32 %v173, 4294901760
    %175 = vmatpush1.msra.mxu0 %v174
    %176 = vmatprep.subr.mxu0 0.0
    %v177 = vand.u32 %v57, 4294901760
    %v178 = vsub.f32 %v57, %v177
    %v179 = vand.u32 %v178, 4294901760
    %v180 = vsub.f32 %v178, %v179
    %v181 = vand.u32 %v180, 4294901760
    %182 = vmatpush1.msra.mxu0 %v181
    %183 = vmatprep.subr.mxu0 0.0
    %v184 = vand.u32 %v58, 4294901760
    %v185 = vsub.f32 %v58, %v184
    %v186 = vand.u32 %v185, 4294901760
    %v187 = vsub.f32 %v185, %v186
    %v188 = vand.u32 %v187, 4294901760
    %189 = vmatpush1.msra.mxu0 %v188
    %190 = vmatprep.subr.mxu0 0.0
    %191 = vmatpush1.msra.mxu0 0.0
    %192 = vmatprep.subr.mxu0 0.0
    %193 = vmatpush1.msra.mxu0 0.0
    %194 = vmatprep.subr.mxu0 0.0
    %195 = vmatpush1.msra.mxu0 0.0
    %196 = vmatprep.subr.mxu0 0.0
    %197 = vmatpush1.msra.mxu0 0.0
    %198 = vmatprep.subr.mxu0 0.0
    %199 = vmatpush1.msra.mxu0 0.0
    %200 = vmatprep.subr.mxu0 0.0
    %201 = vmatpush1.msra.mxu0 0.0
    %202 = vmatprep.subr.mxu0 0.0
    %203 = vmatpush1.msra.mxu0 0.0
    %204 = vmatprep.subr.mxu0 0.0
    %205 = vmatpush1.msra.mxu0 0.0
    %206 = vmatprep.subr.mxu0 0.0
    %207 = vmatpush1.msra.mxu0 0.0
    %208 = vmatprep.subr.mxu0 0.0
    %209 = vmatpush1.msra.mxu0 0.0
    %210 = vmatprep.subr.mxu0 0.0
    %211 = vmatpush1.msra.mxu0 0.0
    %212 = vmatprep.subr.mxu0 0.0
    %213 = vmatpush1.msra.mxu0 0.0
    %214 = vmatprep.subr.mxu0 0.0
    %215 = vmatpush1.msra.mxu0 0.0
    %216 = vmatprep.subr.mxu0 0.0
    %217 = vmatpush1.msra.mxu0 0.0
    %218 = vmatprep.subr.mxu0 0.0
    %219 = vmatpush1.msra.mxu0 0.0
    %220 = vmatprep.subr.mxu0 0.0
    %221 = vmatpush1.msra.mxu0 0.0
    %222 = vmatprep.subr.mxu0 0.0
    %223 = vmatpush1.msra.mxu0 0.0
    %224 = vmatprep.subr.mxu0 0.0
    %225 = vmatpush1.msra.mxu0 0.0
    %226 = vmatprep.subr.mxu0 0.0
    %227 = vmatpush1.msra.mxu0 0.0
    %228 = vmatprep.subr.mxu0 0.0
    %229 = vmatpush1.msra.mxu0 0.0
    %230 = vmatprep.subr.mxu0 0.0
    %231 = vmatpush1.msra.mxu0 0.0
    %232 = vmatprep.subr.mxu0 0.0
    %233 = vmatpush1.msra.mxu0 0.0
    %234 = vmatprep.subr.mxu0 0.0
    %235 = vmatpush1.msra.mxu0 0.0
    %236 = vmatprep.subr.mxu0 0.0
    %237 = vmatpush1.msra.mxu0 0.0
    %238 = vmatprep.subr.mxu0 0.0
    %239 = vmatpush1.msra.mxu0 0.0
    %240 = vmatprep.subr.mxu0 0.0
    %241 = vmatpush1.msra.mxu0 0.0
    %242 = vmatprep.subr.mxu0 0.0
    %243 = vmatpush1.msra.mxu0 0.0
    %244 = vmatprep.subr.mxu0 0.0
    %245 = vmatpush1.msra.mxu0 0.0
    %246 = vmatprep.mubr.f32.mxu0 0.0
    %v247 = vand.u32 %v68, 4294901760
    %248 = vmatmul.mubr.f32.gmra.mrb[0].mxu0 %v247
    %v249 = vpop.f32.mrb[0].mxu0
    %v250 = vadd.f32 %v149, %v249
    %v251 = vpop.f32.mrb[0].mxu0
    %252 = vmatprep.mubr.f32.mxu0 0.0
    %v253 = vand.u32 %v71, 4294901760
    %254 = vmatmul.mubr.f32.gmra.mrb[0].mxu0 %v253
    %v255 = vpop.f32.mrb[0].mxu0
    %v256 = vadd.f32 %v159, %v255
    %v257 = vpop.f32.mrb[0].mxu0
    %258 = vdwg.mxu0
    %259 = vmatprep.subr.mxu0 0.0
    %v260 = vand.u32 %v55, 4294901760
    %v261 = vsub.f32 %v55, %v260
    %262 = vmatpush1.msra.mxu0 %v261
    %263 = vmatprep.subr.mxu0 0.0
    %v264 = vand.u32 %v56, 4294901760
    %v265 = vsub.f32 %v56, %v264
    %266 = vmatpush1.msra.mxu0 %v265
    %267 = vmatprep.subr.mxu0 0.0
    %v268 = vand.u32 %v57, 4294901760
    %v269 = vsub.f32 %v57, %v268
    %270 = vmatpush1.msra.mxu0 %v269
    %271 = vmatprep.subr.mxu0 0.0
    %v272 = vand.u32 %v58, 4294901760
    %v273 = vsub.f32 %v58, %v272
    %274 = vmatpush1.msra.mxu0 %v273
    %275 = vmatprep.subr.mxu0 0.0
    %276 = vmatpush1.msra.mxu0 0.0
    %277 = vmatprep.subr.mxu0 0.0
    %278 = vmatpush1.msra.mxu0 0.0
    %279 = vmatprep.subr.mxu0 0.0
    %280 = vmatpush1.msra.mxu0 0.0
    %281 = vmatprep.subr.mxu0 0.0
    %282 = vmatpush1.msra.mxu0 0.0
    %283 = vmatprep.subr.mxu0 0.0
    %284 = vmatpush1.msra.mxu0 0.0
    %285 = vmatprep.subr.mxu0 0.0
    %286 = vmatpush1.msra.mxu0 0.0
    %287 = vmatprep.subr.mxu0 0.0
    %288 = vmatpush1.msra.mxu0 0.0
    %289 = vmatprep.subr.mxu0 0.0
    %290 = vmatpush1.msra.mxu0 0.0
    %291 = vmatprep.subr.mxu0 0.0
    %292 = vmatpush1.msra.mxu0 0.0
    %293 = vmatprep.subr.mxu0 0.0
    %294 = vmatpush1.msra.mxu0 0.0
    %295 = vmatprep.subr.mxu0 0.0
    %296 = vmatpush1.msra.mxu0 0.0
    %297 = vmatprep.subr.mxu0 0.0
    %298 = vmatpush1.msra.mxu0 0.0
    %299 = vmatprep.subr.mxu0 0.0
    %300 = vmatpush1.msra.mxu0 0.0
    %301 = vmatprep.subr.mxu0 0.0
    %302 = vmatpush1.msra.mxu0 0.0
    %303 = vmatprep.subr.mxu0 0.0
    %304 = vmatpush1.msra.mxu0 0.0
    %305 = vmatprep.subr.mxu0 0.0
    %306 = vmatpush1.msra.mxu0 0.0
    %307 = vmatprep.subr.mxu0 0.0
    %308 = vmatpush1.msra.mxu0 0.0
    %309 = vmatprep.subr.mxu0 0.0
    %310 = vmatpush1.msra.mxu0 0.0
    %311 = vmatprep.subr.mxu0 0.0
    %312 = vmatpush1.msra.mxu0 0.0
    %313 = vmatprep.subr.mxu0 0.0
    %314 = vmatpush1.msra.mxu0 0.0
    %315 = vmatprep.subr.mxu0 0.0
    %316 = vmatpush1.msra.mxu0 0.0
    %317 = vmatprep.subr.mxu0 0.0
    %318 = vmatpush1.msra.mxu0 0.0
    %319 = vmatprep.subr.mxu0 0.0
    %320 = vmatpush1.msra.mxu0 0.0
    %321 = vmatprep.subr.mxu0 0.0
    %322 = vmatpush1.msra.mxu0 0.0
    %323 = vmatprep.subr.mxu0 0.0
    %324 = vmatpush1.msra.mxu0 0.0
    %325 = vmatprep.subr.mxu0 0.0
    %326 = vmatpush1.msra.mxu0 0.0
    %327 = vmatprep.subr.mxu0 0.0
    %328 = vmatpush1.msra.mxu0 0.0
    %329 = vmatprep.subr.mxu0 0.0
    %330 = vmatpush1.msra.mxu0 0.0
    %331 = vmatprep.mubr.f32.mxu0 0.0
    %v332 = vand.u32 %v68, 4294901760
    %v333 = vsub.f32 %v68, %v332
    %334 = vmatmul.mubr.f32.gmra.mrb[0].mxu0 %v333
    %v335 = vpop.f32.mrb[0].mxu0
    %v336 = vadd.f32 %v250, %v335
    %v337 = vpop.f32.mrb[0].mxu0
    %338 = vmatprep.mubr.f32.mxu0 0.0
    %v339 = vand.u32 %v71, 4294901760
    %v340 = vsub.f32 %v71, %v339
    %341 = vmatmul.mubr.f32.gmra.mrb[0].mxu0 %v340
    %v342 = vpop.f32.mrb[0].mxu0
    %v343 = vadd.f32 %v256, %v342
    %v344 = vpop.f32.mrb[0].mxu0
    %345 = vdwg.mxu0
    %346 = vmatprep.subr.mxu0 0.0
    %v347 = vand.u32 %v55, 4294901760
    %348 = vmatpush1.msra.mxu0 %v347
    %349 = vmatprep.subr.mxu0 0.0
    %v350 = vand.u32 %v56, 4294901760
    %351 = vmatpush1.msra.mxu0 %v350
    %352 = vmatprep.subr.mxu0 0.0
    %v353 = vand.u32 %v57, 4294901760
    %354 = vmatpush1.msra.mxu0 %v353
    %355 = vmatprep.subr.mxu0 0.0
    %v356 = vand.u32 %v58, 4294901760
    %357 = vmatpush1.msra.mxu0 %v356
    %358 = vmatprep.subr.mxu0 0.0
    %359 = vmatpush1.msra.mxu0 0.0
    %360 = vmatprep.subr.mxu0 0.0
    %361 = vmatpush1.msra.mxu0 0.0
    %362 = vmatprep.subr.mxu0 0.0
    %363 = vmatpush1.msra.mxu0 0.0
    %364 = vmatprep.subr.mxu0 0.0
    %365 = vmatpush1.msra.mxu0 0.0
    %366 = vmatprep.subr.mxu0 0.0
    %367 = vmatpush1.msra.mxu0 0.0
    %368 = vmatprep.subr.mxu0 0.0
    %369 = vmatpush1.msra.mxu0 0.0
    %370 = vmatprep.subr.mxu0 0.0
    %371 = vmatpush1.msra.mxu0 0.0
    %372 = vmatprep.subr.mxu0 0.0
    %373 = vmatpush1.msra.mxu0 0.0
    %374 = vmatprep.subr.mxu0 0.0
    %375 = vmatpush1.msra.mxu0 0.0
    %376 = vmatprep.subr.mxu0 0.0
    %377 = vmatpush1.msra.mxu0 0.0
    %378 = vmatprep.subr.mxu0 0.0
    %379 = vmatpush1.msra.mxu0 0.0
    %380 = vmatprep.subr.mxu0 0.0
    %381 = vmatpush1.msra.mxu0 0.0
    %382 = vmatprep.subr.mxu0 0.0
    %383 = vmatpush1.msra.mxu0 0.0
    %384 = vmatprep.subr.mxu0 0.0
    %385 = vmatpush1.msra.mxu0 0.0
    %386 = vmatprep.subr.mxu0 0.0
    %387 = vmatpush1.msra.mxu0 0.0
    %388 = vmatprep.subr.mxu0 0.0
    %389 = vmatpush1.msra.mxu0 0.0
    %390 = vmatprep.subr.mxu0 0.0
    %391 = vmatpush1.msra.mxu0 0.0
    %392 = vmatprep.subr.mxu0 0.0
    %393 = vmatpush1.msra.mxu0 0.0
    %394 = vmatprep.subr.mxu0 0.0
    %395 = vmatpush1.msra.mxu0 0.0
    %396 = vmatprep.subr.mxu0 0.0
    %397 = vmatpush1.msra.mxu0 0.0
    %398 = vmatprep.subr.mxu0 0.0
    %399 = vmatpush1.msra.mxu0 0.0
    %400 = vmatprep.subr.mxu0 0.0
    %401 = vmatpush1.msra.mxu0 0.0
    %402 = vmatprep.subr.mxu0 0.0
    %403 = vmatpush1.msra.mxu0 0.0
    %404 = vmatprep.subr.mxu0 0.0
    %405 = vmatpush1.msra.mxu0 0.0
    %406 = vmatprep.subr.mxu0 0.0
    %407 = vmatpush1.msra.mxu0 0.0
    %408 = vmatprep.subr.mxu0 0.0
    %409 = vmatpush1.msra.mxu0 0.0
    %410 = vmatprep.subr.mxu0 0.0
    %411 = vmatpush1.msra.mxu0 0.0
    %412 = vmatprep.subr.mxu0 0.0
    %413 = vmatpush1.msra.mxu0 0.0
    %414 = vmatprep.mubr.f32.mxu0 0.0
    %v415 = vand.u32 %v68, 4294901760
    %v416 = vsub.f32 %v68, %v415
    %v417 = vand.u32 %v416, 4294901760
    %418 = vmatmul.mubr.f32.gmra.mrb[0].mxu0 %v417
    %v419 = vpop.f32.mrb[0].mxu0
    %v420 = vadd.f32 %v336, %v419
    %v421 = vpop.f32.mrb[0].mxu0
    %422 = vmatprep.mubr.f32.mxu0 0.0
    %v423 = vand.u32 %v71, 4294901760
    %v424 = vsub.f32 %v71, %v423
    %v425 = vand.u32 %v424, 4294901760
    %426 = vmatmul.mubr.f32.gmra.mrb[0].mxu0 %v425
    %v427 = vpop.f32.mrb[0].mxu0
    %v428 = vadd.f32 %v343, %v427
    %v429 = vpop.f32.mrb[0].mxu0
    %430 = vdwg.mxu0
    %431 = vmatprep.subr.mxu0 0.0
    %v432 = vand.u32 %v55, 4294901760
    %v433 = vsub.f32 %v55, %v432
    %v434 = vand.u32 %v433, 4294901760
    %435 = vmatpush1.msra.mxu0 %v434
    %436 = vmatprep.subr.mxu0 0.0
    %v437 = vand.u32 %v56, 4294901760
    %v438 = vsub.f32 %v56, %v437
    %v439 = vand.u32 %v438, 4294901760
    %440 = vmatpush1.msra.mxu0 %v439
    %441 = vmatprep.subr.mxu0 0.0
    %v442 = vand.u32 %v57, 4294901760
    %v443 = vsub.f32 %v57, %v442
    %v444 = vand.u32 %v443, 4294901760
    %445 = vmatpush1.msra.mxu0 %v444
    %446 = vmatprep.subr.mxu0 0.0
    %v447 = vand.u32 %v58, 4294901760
    %v448 = vsub.f32 %v58, %v447
    %v449 = vand.u32 %v448, 4294901760
    %450 = vmatpush1.msra.mxu0 %v449
    %451 = vmatprep.subr.mxu0 0.0
    %452 = vmatpush1.msra.mxu0 0.0
    %453 = vmatprep.subr.mxu0 0.0
    %454 = vmatpush1.msra.mxu0 0.0
    %455 = vmatprep.subr.mxu0 0.0
    %456 = vmatpush1.msra.mxu0 0.0
    %457 = vmatprep.subr.mxu0 0.0
    %458 = vmatpush1.msra.mxu0 0.0
    %459 = vmatprep.subr.mxu0 0.0
    %460 = vmatpush1.msra.mxu0 0.0
    %461 = vmatprep.subr.mxu0 0.0
    %462 = vmatpush1.msra.mxu0 0.0
    %463 = vmatprep.subr.mxu0 0.0
    %464 = vmatpush1.msra.mxu0 0.0
    %465 = vmatprep.subr.mxu0 0.0
    %466 = vmatpush1.msra.mxu0 0.0
    %467 = vmatprep.subr.mxu0 0.0
    %468 = vmatpush1.msra.mxu0 0.0
    %469 = vmatprep.subr.mxu0 0.0
    %470 = vmatpush1.msra.mxu0 0.0
    %471 = vmatprep.subr.mxu0 0.0
    %472 = vmatpush1.msra.mxu0 0.0
    %473 = vmatprep.subr.mxu0 0.0
    %474 = vmatpush1.msra.mxu0 0.0
    %475 = vmatprep.subr.mxu0 0.0
    %476 = vmatpush1.msra.mxu0 0.0
    %477 = vmatprep.subr.mxu0 0.0
    %478 = vmatpush1.msra.mxu0 0.0
    %479 = vmatprep.subr.mxu0 0.0
    %480 = vmatpush1.msra.mxu0 0.0
    %481 = vmatprep.subr.mxu0 0.0
    %482 = vmatpush1.msra.mxu0 0.0
    %483 = vmatprep.subr.mxu0 0.0
    %484 = vmatpush1.msra.mxu0 0.0
    %485 = vmatprep.subr.mxu0 0.0
    %486 = vmatpush1.msra.mxu0 0.0
    %487 = vmatprep.subr.mxu0 0.0
    %488 = vmatpush1.msra.mxu0 0.0
    %489 = vmatprep.subr.mxu0 0.0
    %490 = vmatpush1.msra.mxu0 0.0
    %491 = vmatprep.subr.mxu0 0.0
    %492 = vmatpush1.msra.mxu0 0.0
    %493 = vmatprep.subr.mxu0 0.0
    %494 = vmatpush1.msra.mxu0 0.0
    %495 = vmatprep.subr.mxu0 0.0
    %496 = vmatpush1.msra.mxu0 0.0
    %497 = vmatprep.subr.mxu0 0.0
    %498 = vmatpush1.msra.mxu0 0.0
    %499 = vmatprep.subr.mxu0 0.0
    %500 = vmatpush1.msra.mxu0 0.0
    %501 = vmatprep.subr.mxu0 0.0
    %502 = vmatpush1.msra.mxu0 0.0
    %503 = vmatprep.subr.mxu0 0.0
    %504 = vmatpush1.msra.mxu0 0.0
    %505 = vmatprep.subr.mxu0 0.0
    %506 = vmatpush1.msra.mxu0 0.0
    %507 = vmatprep.mubr.f32.mxu0 0.0
    %v508 = vand.u32 %v68, 4294901760
    %509 = vmatmul.mubr.f32.gmra.mrb[0].mxu0 %v508
    %v510 = vpop.f32.mrb[0].mxu0
    %v511 = vadd.f32 %v420, %v510
    %v512 = vpop.f32.mrb[0].mxu0
    %513 = vmatprep.mubr.f32.mxu0 0.0
    %v514 = vand.u32 %v71, 4294901760
    %515 = vmatmul.mubr.f32.gmra.mrb[0].mxu0 %v514
    %v516 = vpop.f32.mrb[0].mxu0
    %v517 = vadd.f32 %v428, %v516
    %v518 = vpop.f32.mrb[0].mxu0
    %519 = vdwg.mxu0
    %520 = vmatprep.subr.mxu0 0.0
    %v521 = vand.u32 %v55, 4294901760
    %522 = vmatpush1.msra.mxu0 %v521
    %523 = vmatprep.subr.mxu0 0.0
    %v524 = vand.u32 %v56, 4294901760
    %525 = vmatpush1.msra.mxu0 %v524
    %526 = vmatprep.subr.mxu0 0.0
    %v527 = vand.u32 %v57, 4294901760
    %528 = vmatpush1.msra.mxu0 %v527
    %529 = vmatprep.subr.mxu0 0.0
    %v530 = vand.u32 %v58, 4294901760
    %531 = vmatpush1.msra.mxu0 %v530
    %532 = vmatprep.subr.mxu0 0.0
    %533 = vmatpush1.msra.mxu0 0.0
    %534 = vmatprep.subr.mxu0 0.0
    %535 = vmatpush1.msra.mxu0 0.0
    %536 = vmatprep.subr.mxu0 0.0
    %537 = vmatpush1.msra.mxu0 0.0
    %538 = vmatprep.subr.mxu0 0.0
    %539 = vmatpush1.msra.mxu0 0.0
    %540 = vmatprep.subr.mxu0 0.0
    %541 = vmatpush1.msra.mxu0 0.0
    %542 = vmatprep.subr.mxu0 0.0
    %543 = vmatpush1.msra.mxu0 0.0
    %544 = vmatprep.subr.mxu0 0.0
    %545 = vmatpush1.msra.mxu0 0.0
    %546 = vmatprep.subr.mxu0 0.0
    %547 = vmatpush1.msra.mxu0 0.0
    %548 = vmatprep.subr.mxu0 0.0
    %549 = vmatpush1.msra.mxu0 0.0
    %550 = vmatprep.subr.mxu0 0.0
    %551 = vmatpush1.msra.mxu0 0.0
    %552 = vmatprep.subr.mxu0 0.0
    %553 = vmatpush1.msra.mxu0 0.0
    %554 = vmatprep.subr.mxu0 0.0
    %555 = vmatpush1.msra.mxu0 0.0
    %556 = vmatprep.subr.mxu0 0.0
    %557 = vmatpush1.msra.mxu0 0.0
    %558 = vmatprep.subr.mxu0 0.0
    %559 = vmatpush1.msra.mxu0 0.0
    %560 = vmatprep.subr.mxu0 0.0
    %561 = vmatpush1.msra.mxu0 0.0
    %562 = vmatprep.subr.mxu0 0.0
    %563 = vmatpush1.msra.mxu0 0.0
    %564 = vmatprep.subr.mxu0 0.0
    %565 = vmatpush1.msra.mxu0 0.0
    %566 = vmatprep.subr.mxu0 0.0
    %567 = vmatpush1.msra.mxu0 0.0
    %568 = vmatprep.subr.mxu0 0.0
    %569 = vmatpush1.msra.mxu0 0.0
    %570 = vmatprep.subr.mxu0 0.0
    %571 = vmatpush1.msra.mxu0 0.0
    %572 = vmatprep.subr.mxu0 0.0
    %573 = vmatpush1.msra.mxu0 0.0
    %574 = vmatprep.subr.mxu0 0.0
    %575 = vmatpush1.msra.mxu0 0.0
    %576 = vmatprep.subr.mxu0 0.0
    %577 = vmatpush1.msra.mxu0 0.0
    %578 = vmatprep.subr.mxu0 0.0
    %579 = vmatpush1.msra.mxu0 0.0
    %580 = vmatprep.subr.mxu0 0.0
    %581 = vmatpush1.msra.mxu0 0.0
    %582 = vmatprep.subr.mxu0 0.0
    %583 = vmatpush1.msra.mxu0 0.0
    %584 = vmatprep.subr.mxu0 0.0
    %585 = vmatpush1.msra.mxu0 0.0
    %586 = vmatprep.subr.mxu0 0.0
    %587 = vmatpush1.msra.mxu0 0.0
    %588 = vmatprep.mubr.f32.mxu0 0.0
    %v589 = vand.u32 %v68, 4294901760
    %590 = vmatmul.mubr.f32.gmra.mrb[0].mxu0 %v589
    %v591 = vpop.f32.mrb[0].mxu0
    %v592 = vadd.f32 %v511, %v591
    %v593 = vpop.f32.mrb[0].mxu0
    %594 = vmatprep.mubr.f32.mxu0 0.0
    %v595 = vand.u32 %v71, 4294901760
    %596 = vmatmul.mubr.f32.gmra.mrb[0].mxu0 %v595
    %v597 = vpop.f32.mrb[0].mxu0
    %v598 = vadd.f32 %v517, %v597
    %v599 = vpop.f32.mrb[0].mxu0
    %600 = vdwg.mxu0
    %v601 = vmax.f32 %v592, 0.0
    %v602 = vmax.f32 %v598, 0.0
    %v603 = vld [vmem:[%s3] sm:$0x1]
    %v605 = vlaneseq
    %v606 = vshrl.u32 %v605, 7
    %v607 = vsub.s32 0, %v606
    %v608 = vrot.slane %v603, %v607
    %v610 = vmul.f32 %v601, %v608
    %v611 = vmul.f32 %v602, %v608
    %v612 = vsel %vm66, %v610, 0.0
    %613 = vadd.xlane.f32.xlu0 %v612
    %v614 = vpop.xlane.xlu0 %613
    %v615 = vsel %vm66, %v611, 0.0
    %616 = vadd.xlane.f32.xlu0 %v615
    %v617 = vpop.xlane.xlu0 %616
    %s618 = sld [smem:[#allocation2]]
    %v619 = vstv %s618
    %v620 = vadd.f32 %v614, %v619
    %v621 = vadd.f32 %v617, %v619
    %v624 = vlaneseq
    %v625 = vand.u32 %v624, 127
    %v626 = vlaneseq
    %v627 = vshrl.u32 %v626, 7
    %v628 = vsub.s32 %v625, %v627
    %v629 = vrot.slane %v620, %v628
    %v630 = vlaneseq
    %v631 = vshrl.u32 %v630, 7
    %v632 = vsub.s32 %v625, %v631
    %v633 = vrot.slane %v621, %v632
    %vm634 = vcmask 1041409
    %v635 = vsel %vm634, %v633, %v629
    %vm637 = vcmask 58368
    %v638 = vsel %vm637, %v635, -inf
    %639 = vmax.xlane.f32.xlu0 %v638
    %v640 = vpop.xlane.xlu0 %639
    %v642 = vlaneseq
    %v643 = vshrl.u32 %v642, 7
    %v644 = vsub.s32 0, %v643
    %v645 = vrot.slane %v640, %v644
    %v646 = vlaneseq
    %v647 = vshrl.u32 %v646, 7
    %v648 = vsub.s32 1, %v647
    %v649 = vrot.slane %v640, %v648
    %v652 = vsub.f32 %v620, %v645
    %v653 = vsub.f32 %v621, %v649
    %v654 = vmul.f32 %v652, 1.442695
    %v655 = vpow.pop %v654
    %v656 = vmul.f32 %v653, 1.442695
    %v657 = vpow.pop %v656
    %660 = vset.pattern.permute.xlu0 0
    %661 = vperm.xlu0 %660, %v655
    %v662 = vpop.permute.xlu0 %661
    %663 = vset.pattern.permute.xlu0 0
    %664 = vperm.xlu0 %663, %v657
    %v665 = vpop.permute.xlu0 %664
    %v666 = vlaneseq
    %v667 = vshrl.u32 %v666, 7
    %v668 = vsub.s32 %v625, %v667
    %v669 = vrot.slane %v662, %v668
    %v670 = vlaneseq
    %v671 = vshrl.u32 %v670, 7
    %v672 = vsub.s32 %v625, %v671
    %v673 = vrot.slane %v665, %v672
    %v674 = vsel %vm634, %v673, %v669
    %v676 = vsel %vm637, %v674, 0.0
    %677 = vadd.xlane.f32.xlu0 %v676
    %v678 = vpop.xlane.xlu0 %677
    %v680 = vlaneseq
    %v681 = vshrl.u32 %v680, 7
    %v682 = vsub.s32 0, %v681
    %v683 = vrot.slane %v678, %v682
    %v684 = vlaneseq
    %v685 = vshrl.u32 %v684, 7
    %v686 = vsub.s32 1, %v685
    %v687 = vrot.slane %v678, %v686
    %v690 = vrcp.pop %v683
    %v691 = vmul.f32 %v655, %v690
    %v692 = vrcp.pop %v687
    %v693 = vmul.f32 %v657, %v692
    %695 = vset.pattern.permute.xlu0 0
    %696 = vperm.xlu0 %695, %v691
    %v697 = vpop.permute.xlu0 %696
    %700 = vset.pattern.permute.xlu0 0
    %701 = vperm.xlu0 %700, %v693
    %v702 = vpop.permute.xlu0 %701
    %v704 = vmul.f32 %v53, %v697
    %v705 = vmul.f32 %v54, %v702
    %v706 = vsel %vm66, %v704, 0.0
    %v707 = vrot.slane %v706, 4
    %v708 = vadd.f32 %v706, %v707
    %v709 = vrot.slane %v708, 2
    %v710 = vadd.f32 %v708, %v709
    %v711 = vrot.slane %v710, 1
    %v712 = vadd.f32 %v710, %v711
    %v713 = vsel %vm66, %v705, 0.0
    %v714 = vrot.slane %v713, 4
    %v715 = vadd.f32 %v713, %v714
    %v716 = vrot.slane %v715, 2
    %v717 = vadd.f32 %v715, %v716
    %v718 = vrot.slane %v717, 1
    %v719 = vadd.f32 %v717, %v718
    %v722 = vsel %vm634, %v719, %v712
    %vm724 = vcmask 254976
    %725 = vst.msk [vmem:[#allocation8] sm:$0x3] %vm724, %v722
    %v726 = vlaneseq
    %v727 = vshrl.u32 %v726, 7
    %v728 = vsub.s32 %v625, %v727
    %v729 = vrot.slane %v697, %v728
    %v730 = vlaneseq
    %v731 = vshrl.u32 %v730, 7
    %v732 = vsub.s32 %v625, %v731
    %v733 = vrot.slane %v702, %v732
    %v734 = vsel %vm634, %v733, %v729
    %736 = vst.msk [vmem:[#allocation9] sm:$0x3] %vm637, %v734
    // Predicated region
    $region30: #{tpu_custom_call.1} parent=1 // pred_check
      _
    $region31: #{tpu_custom_call.1} parent=1 // pred_check_branch
      %738 = sbr.rel (0) target = $region33
    $region32: #{tpu_custom_call.1} parent=1 // pred_region
      %s740 = ssub.s32 32, 32
      %741 = vsyncadd [#allocation5], %s740
      %s743 = sshll.u32 [#allocation8], 4
      %s744 = int_to_ptr.vmem [resolvable:$true] %s743
      %746 = dma.vmem_to_hbm [thread:$0]  %s744, 32, %s5, [#allocation5]
    $region33: #{tpu_custom_call.1} parent=1 // pred_fallthru
      _
    // Predicated region
    $region34: #{tpu_custom_call.1} parent=1 // pred_check
      _
    $region35: #{tpu_custom_call.1} parent=1 // pred_check_branch
      %748 = sbr.rel (0) target = $region37
    $region36: #{tpu_custom_call.1} parent=1 // pred_region
      %s750 = ssub.s32 32, 32
      %751 = vsyncadd [#allocation10], %s750
      %s753 = sshll.u32 [#allocation9], 4
      %s754 = int_to_ptr.vmem [resolvable:$true] %s753
      %756 = dma.vmem_to_hbm [thread:$0]  %s754, 32, %s6, [#allocation10]
    $region37: #{tpu_custom_call.1} parent=1 // pred_fallthru
      _
    // Predicated region
    $region38: #{tpu_custom_call.1} parent=1 // pred_check
      _
    $region39: #{tpu_custom_call.1} parent=1 // pred_check_branch
      %758 = sbr.rel (0) target = $region41
    $region40: #{tpu_custom_call.1} parent=1 // pred_region
      %759 = dma.done [#allocation5], 32
    $region41: #{tpu_custom_call.1} parent=1 // pred_fallthru
      _
    // Predicated region
    $region42: #{tpu_custom_call.1} parent=1 // pred_check
      _
    $region43: #{tpu_custom_call.1} parent=1 // pred_check_branch
      %761 = sbr.rel (0) target = $region45
    $region44: #{tpu_custom_call.1} parent=1 // pred_region
      %762 = dma.done [#allocation10], 32
    $region45: #{tpu_custom_call.1} parent=1 // pred_fallthru
      _
    %763 = vsyncpa [#allocation4], 1
    %764 = vsyncpa [#allocation7], 1
    %765 = vsyncpa [#allocation5], 1
    %766 = vsyncpa [#allocation10], 1

</llo_original>
